<compile_context>
chip_gen: v5e
topology: v5e:2x2
jax: 0.10.0
libtpu: 0.0.40
codegen_flags: <defaults>
</compile_context>

<pallas_src>
import functools

import jax
import jax.numpy as jnp
from jax.experimental import pallas as pl
from jax.experimental.pallas import tpu as pltpu


# ----------------------------------------------------------------------------
# helpers
# ----------------------------------------------------------------------------
def _round_up(x, m):
    return (x + m - 1) // m * m


def _row_tile(rows, row_bytes, cap_bytes=2 * 1024 * 1024, max_rows=1024):
    """Pick a row-tile: full array if small, else a 16-aligned tile capped both by
    a byte budget (VMEM-friendly under default scoped limits with double
    buffering) and max_rows."""
    cap = (cap_bytes // max(row_bytes, 1)) // 16 * 16
    cap = max(16, min(max_rows, cap))
    if rows <= cap:
        return rows  # full dim -> always a legal block shape
    return cap


# ----------------------------------------------------------------------------
# Pallas kernels
# ----------------------------------------------------------------------------
def _bnrelu_kernel(x_ref, sc_ref, sh_ref, o_ref):
    # x: (TR, L), scale/shift: (1, L) broadcast over rows; elementwise math in f32.
    o_ref[...] = jnp.maximum(x_ref[...] * sc_ref[...] + sh_ref[...], 0.0)


def bn_relu(x_nhwc, scale, shift):
    """Fused eval-mode BN + ReLU.  Flattened to (N*H, W*C) so the last dim is
    lane-dense; tiled over rows with parallel semantics."""
    N, H, W, C = x_nhwc.shape
    R, L = N * H, W * C
    x2 = x_nhwc.reshape(R, L)
    sc = jnp.tile(scale.astype(jnp.float32), W).reshape(1, L)
    sh = jnp.tile(shift.astype(jnp.float32), W).reshape(1, L)

    TR = _row_tile(R, L * 4)
    out = pl.pallas_call(
        _bnrelu_kernel,
        out_shape=jax.ShapeDtypeStruct((R, L), jnp.float32),
        grid=(pl.cdiv(R, TR),),
        in_specs=[
            pl.BlockSpec((TR, L), lambda i: (i, 0)),
            pl.BlockSpec((1, L), lambda i: (0, 0)),
            pl.BlockSpec((1, L), lambda i: (0, 0)),
        ],
        out_specs=pl.BlockSpec((TR, L), lambda i: (i, 0)),
        compiler_params=pltpu.CompilerParams(dimension_semantics=("parallel",)),
    )(x2, sc, sh)
    return out.reshape(N, H, W, C)


def _conv_mm_kernel(*refs, apply_affine, apply_relu, add_residual, add_res_mm):
    it = iter(refs)
    p_ref = next(it)                                   # (TM, K)      bf16
    w_ref = next(it)                                   # (K, CoutP)   bf16
    sc_ref = next(it) if apply_affine else None        # (1, CoutP)   f32
    sh_ref = next(it) if apply_affine else None        # (1, CoutP)   f32
    rp_ref = next(it) if add_res_mm else None          # (TM, Kr)     bf16
    rw_ref = next(it) if add_res_mm else None          # (Kr, CoutP)  bf16
    r_ref = next(it) if add_residual else None         # (TM, CoutP)  f32
    o_ref = next(it)                                   # (TM, CoutP)

    acc = jnp.dot(p_ref[...], w_ref[...], preferred_element_type=jnp.float32)
    if apply_affine:
        acc = acc * sc_ref[...] + sh_ref[...]
    if apply_relu:
        acc = jnp.maximum(acc, 0.0)
    if add_res_mm:
        # fused shortcut projection (1x1 conv) as a second MXU dot
        acc = acc + jnp.dot(rp_ref[...], rw_ref[...],
                            preferred_element_type=jnp.float32)
    if add_residual:
        acc = acc + r_ref[...]
    o_ref[...] = acc.astype(o_ref.dtype)


def conv_matmul(patches, weights, out_scale=None, out_shift=None, *,
                relu=False, residual=None, residual_mm=None,
                out_dtype=jnp.float32):
    """(M, K) @ (K, Cout) with fused affine / ReLU / residual epilogue.

    Operands are bf16 (f32 MXU accumulation); Cout is padded to a multiple of
    128 for lane-dense output stores; M is tiled with 'parallel' semantics.
    `residual` is a dense (M, Cout) f32 add; `residual_mm=(r_patches, r_w)`
    fuses a second matmul (projection shortcut) into the epilogue."""
    M, K = patches.shape
    Kw, Cout = weights.shape
    assert K == Kw
    CoutP = _round_up(Cout, 128)
    pad_c = CoutP - Cout

    p = patches.astype(jnp.bfloat16)
    w = weights.astype(jnp.bfloat16)
    if pad_c:
        w = jnp.pad(w, ((0, 0), (0, pad_c)))

    apply_affine = out_scale is not None
    add_residual = residual is not None
    add_res_mm = residual_mm is not None
    assert not (add_residual and add_res_mm)

    # per-row VMEM footprint (bf16 patches + f32 out [+ residual operands])
    row_bytes = K * 2 + CoutP * 4
    if add_residual:
        row_bytes += CoutP * 4
    if add_res_mm:
        row_bytes += residual_mm[0].shape[1] * 2
    TM = _row_tile(M, row_bytes, max_rows=512)

    in_specs = [
        pl.BlockSpec((TM, K), lambda i: (i, 0)),
        pl.BlockSpec((K, CoutP), lambda i: (0, 0)),
    ]
    args = [p, w]
    if apply_affine:
        sc = out_scale.astype(jnp.float32).reshape(1, Cout)
        sh = out_shift.astype(jnp.float32).reshape(1, Cout)
        if pad_c:
            sc = jnp.pad(sc, ((0, 0), (0, pad_c)))
            sh = jnp.pad(sh, ((0, 0), (0, pad_c)))
        in_specs += [pl.BlockSpec((1, CoutP), lambda i: (0, 0)),
                     pl.BlockSpec((1, CoutP), lambda i: (0, 0))]
        args += [sc, sh]
    if add_res_mm:
        rp, rw = residual_mm
        Kr = rp.shape[1]
        assert rp.shape[0] == M and rw.shape == (Kr, Cout)
        rp = rp.astype(jnp.bfloat16)
        rw = rw.astype(jnp.bfloat16)
        if pad_c:
            rw = jnp.pad(rw, ((0, 0), (0, pad_c)))
        in_specs += [pl.BlockSpec((TM, Kr), lambda i: (i, 0)),
                     pl.BlockSpec((Kr, CoutP), lambda i: (0, 0))]
        args += [rp, rw]
    elif add_residual:
        r = residual.astype(jnp.float32)
        if pad_c:
            r = jnp.pad(r, ((0, 0), (0, pad_c)))
        in_specs.append(pl.BlockSpec((TM, CoutP), lambda i: (i, 0)))
        args.append(r)

    kernel = functools.partial(
        _conv_mm_kernel, apply_affine=apply_affine, apply_relu=relu,
        add_residual=add_residual, add_res_mm=add_res_mm)

    out = pl.pallas_call(
        kernel,
        out_shape=jax.ShapeDtypeStruct((M, CoutP), out_dtype),
        grid=(pl.cdiv(M, TM),),
        in_specs=in_specs,
        out_specs=pl.BlockSpec((TM, CoutP), lambda i: (i, 0)),
        compiler_params=pltpu.CompilerParams(dimension_semantics=("parallel",)),
    )(*args)

    if pad_c:
        out = out[:, :Cout]
    return out


# ----------------------------------------------------------------------------
# Convolutions (im2col glue; taps folded into K; matmul + epilogue in Pallas)
# ----------------------------------------------------------------------------
def conv3x3_fused(x, w_oihw, stride, *, out_scale=None, out_shift=None,
                  relu=False, residual=None, residual_mm=None,
                  out_dtype=jnp.float32):
    # x: (N,H,W,Cin), w_oihw: (Cout,Cin,3,3) PyTorch layout, pad=1, no bias.
    N, H, W, Cin = x.shape
    Cout = w_oihw.shape[0]
    Ho = (H + 2 - 3) // stride + 1
    Wo = (W + 2 - 3) // stride + 1
    M = N * Ho * Wo

    xb = x.astype(jnp.bfloat16)                       # bf16 slab -> half HBM traffic
    xp = jnp.pad(xb, ((0, 0), (1, 1), (1, 1), (0, 0)))
    cols = []
    for dy in range(3):
        for dx in range(3):
            t = xp[:,
                   dy: dy + (Ho - 1) * stride + 1: stride,
                   dx: dx + (Wo - 1) * stride + 1: stride,
                   :]
            cols.append(t.reshape(M, Cin))
    patches = jnp.concatenate(cols, axis=1)                     # (M, 9*Cin) bf16
    w2d = jnp.transpose(w_oihw, (2, 3, 1, 0)).reshape(9 * Cin, Cout)

    res2d = None if residual is None else residual.reshape(M, Cout)
    out = conv_matmul(patches, w2d, out_scale, out_shift,
                      relu=relu, residual=res2d, residual_mm=residual_mm,
                      out_dtype=out_dtype)
    return out.reshape(N, Ho, Wo, Cout)


# ----------------------------------------------------------------------------
# PreActBlock
# ----------------------------------------------------------------------------
class PreActBlockPallas:
    expansion = 1

    def __init__(self, in_planes, planes, stride, key):
        self.stride = stride
        self.has_shortcut = stride != 1 or in_planes != self.expansion * planes
        ks = jax.random.split(key, 12)
        eps = 1e-5

        def bn_params(k0, k1, k2, k3, c):
            gamma = jax.random.uniform(k0, (c,), jnp.float32, 0.5, 1.5)
            beta = 0.1 * jax.random.normal(k1, (c,), jnp.float32)
            mean = 0.1 * jax.random.normal(k2, (c,), jnp.float32)
            var = jax.random.uniform(k3, (c,), jnp.float32, 0.5, 1.5)
            scale = gamma / jnp.sqrt(var + eps)
            shift = beta - mean * scale
            return scale, shift

        self.scale1, self.shift1 = bn_params(ks[0], ks[1], ks[2], ks[3], in_planes)
        self.scale2, self.shift2 = bn_params(ks[4], ks[5], ks[6], ks[7], planes)

        def conv_w(k, cout, cin, kh, kw):
            fan_in = cin * kh * kw
            return jax.random.normal(k, (cout, cin, kh, kw), jnp.float32) * (
                2.0 / fan_in) ** 0.5

        self.w1 = conv_w(ks[8], planes, in_planes, 3, 3)
        self.w2 = conv_w(ks[9], planes, planes, 3, 3)
        if self.has_shortcut:
            self.w_sc = conv_w(ks[10], self.expansion * planes, in_planes, 1, 1)
        else:
            self.w_sc = None

        self._forward = jax.jit(self._fwd_impl)

    def _fwd_impl(self, x_nchw):
        x = jnp.transpose(x_nchw, (0, 2, 3, 1))                    # NCHW -> NHWC
        pre1 = bn_relu(x, self.scale1, self.shift1)                # f32
        pre1_bf = pre1.astype(jnp.bfloat16)

        # conv1 with fused BN2 + ReLU epilogue -> pre2 directly (bf16, halves HBM)
        pre2 = conv3x3_fused(pre1_bf, self.w1, self.stride,
                             out_scale=self.scale2, out_shift=self.shift2,
                             relu=True, out_dtype=jnp.bfloat16)

        if self.has_shortcut:
            # projection shortcut (1x1 conv, stride s) fused into conv2's epilogue
            N, _, _, Cin = pre1_bf.shape
            xs = pre1_bf[:, ::self.stride, ::self.stride, :]
            Ho, Wo = xs.shape[1], xs.shape[2]
            sc_patches = xs.reshape(N * Ho * Wo, Cin)
            cout_sc = self.w_sc.shape[0]
            w_sc2d = jnp.transpose(self.w_sc.reshape(cout_sc, Cin), (1, 0))
            out = conv3x3_fused(pre2, self.w2, 1,
                                residual_mm=(sc_patches, w_sc2d),
                                out_dtype=jnp.float32)
        else:
            # identity shortcut: dense f32 residual add fused into conv2's epilogue
            out = conv3x3_fused(pre2, self.w2, 1, residual=pre1,
                                out_dtype=jnp.float32)
        return jnp.transpose(out, (0, 3, 1, 2))                    # NHWC -> NCHW

    def __call__(self, x_nchw):
        return self._forward(x_nchw)


# ----------------------------------------------------------------------------
# Pure-JAX reference (mirrors the kernel's bf16-operand / f32-accumulate math)
# ----------------------------------------------------------------------------
def _reference_forward(block, x_nchw):
    x = jnp.transpose(x_nchw, (0, 2, 3, 1)).astype(jnp.float32)

    def conv(xx, w_oihw, stride, pad):
        w = jnp.transpose(w_oihw, (2, 3, 1, 0)).astype(jnp.bfloat16)  # OIHW->HWIO
        return jax.lax.conv_general_dilated(
            xx.astype(jnp.bfloat16), w, (stride, stride), pad,
            dimension_numbers=("NHWC", "HWIO", "NHWC"),
            preferred_element_type=jnp.float32)

    pre1 = jnp.maximum(x * block.scale1 + block.shift1, 0.0)
    if block.has_shortcut:
        sc = conv(pre1, block.w_sc, block.stride, ((0, 0), (0, 0)))
    else:
        sc = pre1
    h = conv(pre1, block.w1, block.stride, ((1, 1), (1, 1)))
    pre2 = jnp.maximum(h * block.scale2 + block.shift2, 0.0)
    h2 = conv(pre2, block.w2, 1, ((1, 1), (1, 1)))
    return jnp.transpose(h2 + sc, (0, 3, 1, 2))


# ----------------------------------------------------------------------------
if __name__ == "__main__":
    key = jax.random.PRNGKey(0)

    def run_case(name, N, in_planes, planes, stride, H, W, k):
        kx, kp = jax.random.split(k)
        x = jax.random.normal(kx, (N, in_planes, H, W), jnp.float32)
        block = PreActBlockPallas(in_planes, planes, stride, kp)
        out = jax.block_until_ready(block(x))
        ref = jax.block_until_ready(_reference_forward(block, x))
        assert out.shape == (N, planes, H // stride, W // stride), (name, out.shape)
        err = float(jnp.max(jnp.abs(out - ref)))
        assert err < 2e-2, (name, err)

    k1, k2 = jax.random.split(key)
    # projection-shortcut path (stride 2, channel expansion)
    run_case("proj", N=2, in_planes=4, planes=8, stride=2, H=16, W=16, k=k1)
    # identity-shortcut path (stride 1, same channels)
    run_case("identity", N=2, in_planes=8, planes=8, stride=1, H=8, W=8, k=k2)

    print("KERNEL_OK")
</pallas_src>

<mosaic_0001>
module attributes {stable_mosaic.version = 11 : i64} {
  func.func @_bnrelu_kernel(%arg0: i32, %arg1: memref<32x64xf32, #tpu.memory_space<vmem>>, %arg2: memref<1x64xf32, #tpu.memory_space<vmem>>, %arg3: memref<1x64xf32, #tpu.memory_space<vmem>>, %arg4: memref<32x64xf32, #tpu.memory_space<vmem>>) attributes {dimension_semantics = [#tpu.dimension_semantics<parallel>], iteration_bounds = array<i64: 1>, scalar_prefetch = 0 : i64, scratch_operands = 0 : i64, tpu.core_type = #tpu.core_type<tc>, window_params = [{transform_indices = @transform_0, window_bounds = array<i64: 32, 64>}, {pipeline_mode = #tpu.pipeline_mode<synchronous>, transform_indices = @transform_1, window_bounds = array<i64: 1, 64>}, {pipeline_mode = #tpu.pipeline_mode<synchronous>, transform_indices = @transform_2, window_bounds = array<i64: 1, 64>}, {transform_indices = @transform_3, window_bounds = array<i64: 32, 64>}]} {
    %c0 = arith.constant 0 : index
    %c0_0 = arith.constant 0 : index
    %0 = vector.load %arg1[%c0, %c0_0] : memref<32x64xf32, #tpu.memory_space<vmem>>, vector<32x64xf32>
    %c0_1 = arith.constant 0 : index
    %c0_2 = arith.constant 0 : index
    %1 = vector.load %arg2[%c0_1, %c0_2] : memref<1x64xf32, #tpu.memory_space<vmem>>, vector<1x64xf32>
    %2 = vector.broadcast %1 : vector<1x64xf32> to vector<32x64xf32>
    %3 = arith.mulf %0, %2 : vector<32x64xf32>
    %c0_3 = arith.constant 0 : index
    %c0_4 = arith.constant 0 : index
    %4 = vector.load %arg3[%c0_3, %c0_4] : memref<1x64xf32, #tpu.memory_space<vmem>>, vector<1x64xf32>
    %5 = vector.broadcast %4 : vector<1x64xf32> to vector<32x64xf32>
    %6 = arith.addf %3, %5 : vector<32x64xf32>
    %cst = arith.constant 0.000000e+00 : f32
    %7 = vector.broadcast %cst : f32 to vector<32x64xf32>
    %8 = arith.maximumf %6, %7 : vector<32x64xf32>
    %c0_5 = arith.constant 0 : index
    %c0_6 = arith.constant 0 : index
    %9 = vector.load %arg4[%c0_5, %c0_6] : memref<32x64xf32, #tpu.memory_space<vmem>>, vector<32x64xf32>
    tpu.vector_store %arg4[%c0_5, %c0_6], %8 {strides = array<i32>} : memref<32x64xf32, #tpu.memory_space<vmem>>, vector<32x64xf32>,
    return
  }
  func.func @transform_0(%arg0: i32) -> (i32, i32) {
    %c0_i32 = arith.constant 0 : i32
    %c0_i32_0 = arith.constant 0 : i32
    return %arg0, %c0_i32 : i32, i32
  }
  func.func @transform_1(%arg0: i32) -> (i32, i32) {
    %c0_i32 = arith.constant 0 : i32
    %c0_i32_0 = arith.constant 0 : i32
    %c0_i32_1 = arith.constant 0 : i32
    return %c0_i32, %c0_i32_0 : i32, i32
  }
  func.func @transform_2(%arg0: i32) -> (i32, i32) {
    %c0_i32 = arith.constant 0 : i32
    %c0_i32_0 = arith.constant 0 : i32
    %c0_i32_1 = arith.constant 0 : i32
    return %c0_i32, %c0_i32_0 : i32, i32
  }
  func.func @transform_3(%arg0: i32) -> (i32, i32) {
    %c0_i32 = arith.constant 0 : i32
    %c0_i32_0 = arith.constant 0 : i32
    return %arg0, %c0_i32 : i32, i32
  }
}

module attributes {stable_mosaic.version = 11 : i64} {
  func.func @_conv_mm_kernel(%arg0: i32, %arg1: memref<128x36xbf16, #tpu.memory_space<vmem>>, %arg2: memref<36x128xbf16, #tpu.memory_space<vmem>>, %arg3: memref<1x128xf32, #tpu.memory_space<vmem>>, %arg4: memref<1x128xf32, #tpu.memory_space<vmem>>, %arg5: memref<128x128xbf16, #tpu.memory_space<vmem>>) attributes {dimension_semantics = [#tpu.dimension_semantics<parallel>], iteration_bounds = array<i64: 1>, scalar_prefetch = 0 : i64, scratch_operands = 0 : i64, tpu.core_type = #tpu.core_type<tc>, window_params = [{transform_indices = @transform_0, window_bounds = array<i64: 128, 36>}, {pipeline_mode = #tpu.pipeline_mode<synchronous>, transform_indices = @transform_1, window_bounds = array<i64: 36, 128>}, {pipeline_mode = #tpu.pipeline_mode<synchronous>, transform_indices = @transform_2, window_bounds = array<i64: 1, 128>}, {pipeline_mode = #tpu.pipeline_mode<synchronous>, transform_indices = @transform_3, window_bounds = array<i64: 1, 128>}, {transform_indices = @transform_4, window_bounds = array<i64: 128, 128>}]} {
    %c0 = arith.constant 0 : index
    %c0_0 = arith.constant 0 : index
    %0 = vector.load %arg1[%c0, %c0_0] : memref<128x36xbf16, #tpu.memory_space<vmem>>, vector<128x36xbf16>
    %c0_1 = arith.constant 0 : index
    %c0_2 = arith.constant 0 : index
    %1 = vector.load %arg2[%c0_1, %c0_2] : memref<36x128xbf16, #tpu.memory_space<vmem>>, vector<36x128xbf16>
    %cst = arith.constant dense<0.000000e+00> : vector<128x128xf32>
    %2 = tpu.matmul %0, %1, %cst {dimension_numbers = #tpu.dot_dimension_numbers<[1], [0], [0], [1], [0, 0, 1, 1], [], []>} : vector<128x36xbf16>, vector<36x128xbf16>, vector<128x128xf32> -> vector<128x128xf32>
    %c0_3 = arith.constant 0 : index
    %c0_4 = arith.constant 0 : index
    %3 = vector.load %arg3[%c0_3, %c0_4] : memref<1x128xf32, #tpu.memory_space<vmem>>, vector<1x128xf32>
    %4 = vector.broadcast %3 : vector<1x128xf32> to vector<128x128xf32>
    %5 = arith.mulf %2, %4 : vector<128x128xf32>
    %c0_5 = arith.constant 0 : index
    %c0_6 = arith.constant 0 : index
    %6 = vector.load %arg4[%c0_5, %c0_6] : memref<1x128xf32, #tpu.memory_space<vmem>>, vector<1x128xf32>
    %7 = vector.broadcast %6 : vector<1x128xf32> to vector<128x128xf32>
    %8 = arith.addf %5, %7 : vector<128x128xf32>
    %cst_7 = arith.constant 0.000000e+00 : f32
    %9 = vector.broadcast %cst_7 : f32 to vector<128x128xf32>
    %10 = arith.maximumf %8, %9 : vector<128x128xf32>
    %11 = arith.truncf %10 : vector<128x128xf32> to vector<128x128xbf16>
    %c0_8 = arith.constant 0 : index
    %c0_9 = arith.constant 0 : index
    %12 = vector.load %arg5[%c0_8, %c0_9] : memref<128x128xbf16, #tpu.memory_space<vmem>>, vector<128x128xbf16>
    tpu.vector_store %arg5[%c0_8, %c0_9], %11 {strides = array<i32>} : memref<128x128xbf16, #tpu.memory_space<vmem>>, vector<128x128xbf16>,
    return
  }
  func.func @transform_0(%arg0: i32) -> (i32, i32) {
    %c0_i32 = arith.constant 0 : i32
    %c0_i32_0 = arith.constant 0 : i32
    return %arg0, %c0_i32 : i32, i32
  }
  func.func @transform_1(%arg0: i32) -> (i32, i32) {
    %c0_i32 = arith.constant 0 : i32
    %c0_i32_0 = arith.constant 0 : i32
    %c0_i32_1 = arith.constant 0 : i32
    return %c0_i32, %c0_i32_0 : i32, i32
  }
  func.func @transform_2(%arg0: i32) -> (i32, i32) {
    %c0_i32 = arith.constant 0 : i32
    %c0_i32_0 = arith.constant 0 : i32
    %c0_i32_1 = arith.constant 0 : i32
    return %c0_i32, %c0_i32_0 : i32, i32
  }
  func.func @transform_3(%arg0: i32) -> (i32, i32) {
    %c0_i32 = arith.constant 0 : i32
    %c0_i32_0 = arith.constant 0 : i32
    %c0_i32_1 = arith.constant 0 : i32
    return %c0_i32, %c0_i32_0 : i32, i32
  }
  func.func @transform_4(%arg0: i32) -> (i32, i32) {
    %c0_i32 = arith.constant 0 : i32
    %c0_i32_0 = arith.constant 0 : i32
    return %arg0, %c0_i32 : i32, i32
  }
}

module attributes {stable_mosaic.version = 11 : i64} {
  func.func @_conv_mm_kernel(%arg0: i32, %arg1: memref<128x72xbf16, #tpu.memory_space<vmem>>, %arg2: memref<72x128xbf16, #tpu.memory_space<vmem>>, %arg3: memref<128x4xbf16, #tpu.memory_space<vmem>>, %arg4: memref<4x128xbf16, #tpu.memory_space<vmem>>, %arg5: memref<128x128xf32, #tpu.memory_space<vmem>>) attributes {dimension_semantics = [#tpu.dimension_semantics<parallel>], iteration_bounds = array<i64: 1>, scalar_prefetch = 0 : i64, scratch_operands = 0 : i64, tpu.core_type = #tpu.core_type<tc>, window_params = [{transform_indices = @transform_0, window_bounds = array<i64: 128, 72>}, {pipeline_mode = #tpu.pipeline_mode<synchronous>, transform_indices = @transform_1, window_bounds = array<i64: 72, 128>}, {transform_indices = @transform_2, window_bounds = array<i64: 128, 4>}, {pipeline_mode = #tpu.pipeline_mode<synchronous>, transform_indices = @transform_3, window_bounds = array<i64: 4, 128>}, {transform_indices = @transform_4, window_bounds = array<i64: 128, 128>}]} {
    %c0 = arith.constant 0 : index
    %c0_0 = arith.constant 0 : index
    %0 = vector.load %arg1[%c0, %c0_0] : memref<128x72xbf16, #tpu.memory_space<vmem>>, vector<128x72xbf16>
    %c0_1 = arith.constant 0 : index
    %c0_2 = arith.constant 0 : index
    %1 = vector.load %arg2[%c0_1, %c0_2] : memref<72x128xbf16, #tpu.memory_space<vmem>>, vector<72x128xbf16>
    %cst = arith.constant dense<0.000000e+00> : vector<128x128xf32>
    %2 = tpu.matmul %0, %1, %cst {dimension_numbers = #tpu.dot_dimension_numbers<[1], [0], [0], [1], [0, 0, 1, 1], [], []>} : vector<128x72xbf16>, vector<72x128xbf16>, vector<128x128xf32> -> vector<128x128xf32>
    %c0_3 = arith.constant 0 : index
    %c0_4 = arith.constant 0 : index
    %3 = vector.load %arg3[%c0_3, %c0_4] : memref<128x4xbf16, #tpu.memory_space<vmem>>, vector<128x4xbf16>
    %c0_5 = arith.constant 0 : index
    %c0_6 = arith.constant 0 : index
    %4 = vector.load %arg4[%c0_5, %c0_6] : memref<4x128xbf16, #tpu.memory_space<vmem>>, vector<4x128xbf16>
    %cst_7 = arith.constant dense<0.000000e+00> : vector<128x128xf32>
    %5 = tpu.matmul %3, %4, %cst_7 {dimension_numbers = #tpu.dot_dimension_numbers<[1], [0], [0], [1], [0, 0, 1, 1], [], []>} : vector<128x4xbf16>, vector<4x128xbf16>, vector<128x128xf32> -> vector<128x128xf32>
    %6 = arith.addf %2, %5 : vector<128x128xf32>
    %c0_8 = arith.constant 0 : index
    %c0_9 = arith.constant 0 : index
    %7 = vector.load %arg5[%c0_8, %c0_9] : memref<128x128xf32, #tpu.memory_space<vmem>>, vector<128x128xf32>
    tpu.vector_store %arg5[%c0_8, %c0_9], %6 {strides = array<i32>} : memref<128x128xf32, #tpu.memory_space<vmem>>, vector<128x128xf32>,
    return
  }
  func.func @transform_0(%arg0: i32) -> (i32, i32) {
    %c0_i32 = arith.constant 0 : i32
    %c0_i32_0 = arith.constant 0 : i32
    return %arg0, %c0_i32 : i32, i32
  }
  func.func @transform_1(%arg0: i32) -> (i32, i32) {
    %c0_i32 = arith.constant 0 : i32
    %c0_i32_0 = arith.constant 0 : i32
    %c0_i32_1 = arith.constant 0 : i32
    return %c0_i32, %c0_i32_0 : i32, i32
  }
  func.func @transform_2(%arg0: i32) -> (i32, i32) {
    %c0_i32 = arith.constant 0 : i32
    %c0_i32_0 = arith.constant 0 : i32
    return %arg0, %c0_i32 : i32, i32
  }
  func.func @transform_3(%arg0: i32) -> (i32, i32) {
    %c0_i32 = arith.constant 0 : i32
    %c0_i32_0 = arith.constant 0 : i32
    %c0_i32_1 = arith.constant 0 : i32
    return %c0_i32, %c0_i32_0 : i32, i32
  }
  func.func @transform_4(%arg0: i32) -> (i32, i32) {
    %c0_i32 = arith.constant 0 : i32
    %c0_i32_0 = arith.constant 0 : i32
    return %arg0, %c0_i32 : i32, i32
  }
}

</mosaic_0001>

<llo_original>
// kernel: tile.11
$region0: #{tile.11}
  %s0 = inlined_call_operand.vmem [shape: f32[16,4], index: 0, kind: input, shape index: {}]
  %s1 = inlined_call_operand.vmem [shape: f32[1,64], index: 1, kind: output, shape index: {}]
  $region1: #{tile.11} parent=0
    #allocation0 [shape = 'u8[4096]{0}', space=vmem, size = 0x1000, scoped, tag = 'scoped mem for output reshape']
    %v2 = vld [vmem:[%s0] sm:$0x1]
    %vm3 = vcmask 31744
    %4 = vst.msk [vmem:[#allocation0] sm:$0x1] %vm3, %v2
    %s5 = scalar_lea.vmem %s0, 15
    %v6 = vld [vmem:[%s5] sm:$0x1]
    %7 = vrot.lane.b32.xlu0 %v6, 60
    %v8 = vpop.permute.xlu0 %7
    %vm9 = vcmask 523744
    %10 = vst.msk [vmem:[#allocation0] sm:$0x1] %vm9, %v8
    %s11 = scalar_lea.vmem %s0, 14
    %v12 = vld [vmem:[%s11] sm:$0x1]
    %13 = vrot.lane.b32.xlu0 %v12, 56
    %v14 = vpop.permute.xlu0 %13
    %vm15 = vcmask 490944
    %16 = vst.msk [vmem:[#allocation0] sm:$0x1] %vm15, %v14
    %s17 = scalar_lea.vmem %s0, 13
    %v18 = vld [vmem:[%s17] sm:$0x1]
    %19 = vrot.lane.b32.xlu0 %v18, 52
    %v20 = vpop.permute.xlu0 %19
    %vm21 = vcmask 458144
    %22 = vst.msk [vmem:[#allocation0] sm:$0x1] %vm21, %v20
    %s23 = scalar_lea.vmem %s0, 12
    %v24 = vld [vmem:[%s23] sm:$0x1]
    %25 = vrot.lane.b32.xlu0 %v24, 48
    %v26 = vpop.permute.xlu0 %25
    %vm27 = vcmask 425344
    %28 = vst.msk [vmem:[#allocation0] sm:$0x1] %vm27, %v26
    %s29 = scalar_lea.vmem %s0, 11
    %v30 = vld [vmem:[%s29] sm:$0x1]
    %31 = vrot.lane.b32.xlu0 %v30, 44
    %v32 = vpop.permute.xlu0 %31
    %vm33 = vcmask 392544
    %34 = vst.msk [vmem:[#allocation0] sm:$0x1] %vm33, %v32
    %s35 = scalar_lea.vmem %s0, 10
    %v36 = vld [vmem:[%s35] sm:$0x1]
    %37 = vrot.lane.b32.xlu0 %v36, 40
    %v38 = vpop.permute.xlu0 %37
    %vm39 = vcmask 359744
    %40 = vst.msk [vmem:[#allocation0] sm:$0x1] %vm39, %v38
    %s41 = scalar_lea.vmem %s0, 9
    %v42 = vld [vmem:[%s41] sm:$0x1]
    %43 = vrot.lane.b32.xlu0 %v42, 36
    %v44 = vpop.permute.xlu0 %43
    %vm45 = vcmask 326944
    %46 = vst.msk [vmem:[#allocation0] sm:$0x1] %vm45, %v44
    %s47 = scalar_lea.vmem %s0, 8
    %v48 = vld [vmem:[%s47] sm:$0x1]
    %49 = vrot.lane.b32.xlu0 %v48, 32
    %v50 = vpop.permute.xlu0 %49
    %vm51 = vcmask 294144
    %52 = vst.msk [vmem:[#allocation0] sm:$0x1] %vm51, %v50
    %s53 = scalar_lea.vmem %s0, 7
    %v54 = vld [vmem:[%s53] sm:$0x1]
    %55 = vrot.lane.b32.xlu0 %v54, 28
    %v56 = vpop.permute.xlu0 %55
    %vm57 = vcmask 261344
    %58 = vst.msk [vmem:[#allocation0] sm:$0x1] %vm57, %v56
    %s59 = scalar_lea.vmem %s0, 6
    %v60 = vld [vmem:[%s59] sm:$0x1]
    %61 = vrot.lane.b32.xlu0 %v60, 24
    %v62 = vpop.permute.xlu0 %61
    %vm63 = vcmask 228544
    %64 = vst.msk [vmem:[#allocation0] sm:$0x1] %vm63, %v62
    %s65 = scalar_lea.vmem %s0, 5
    %v66 = vld [vmem:[%s65] sm:$0x1]
    %67 = vrot.lane.b32.xlu0 %v66, 20
    %v68 = vpop.permute.xlu0 %67
    %vm69 = vcmask 195744
    %70 = vst.msk [vmem:[#allocation0] sm:$0x1] %vm69, %v68
    %s71 = scalar_lea.vmem %s0, 4
    %v72 = vld [vmem:[%s71] sm:$0x1]
    %73 = vrot.lane.b32.xlu0 %v72, 16
    %v74 = vpop.permute.xlu0 %73
    %vm75 = vcmask 162944
    %76 = vst.msk [vmem:[#allocation0] sm:$0x1] %vm75, %v74
    %s77 = scalar_lea.vmem %s0, 3
    %v78 = vld [vmem:[%s77] sm:$0x1]
    %79 = vrot.lane.b32.xlu0 %v78, 12
    %v80 = vpop.permute.xlu0 %79
    %vm81 = vcmask 130144
    %82 = vst.msk [vmem:[#allocation0] sm:$0x1] %vm81, %v80
    %s83 = scalar_lea.vmem %s0, 2
    %v84 = vld [vmem:[%s83] sm:$0x1]
    %85 = vrot.lane.b32.xlu0 %v84, 8
    %v86 = vpop.permute.xlu0 %85
    %vm87 = vcmask 97344
    %88 = vst.msk [vmem:[#allocation0] sm:$0x1] %vm87, %v86
    %s89 = scalar_lea.vmem %s0, 1
    %v90 = vld [vmem:[%s89] sm:$0x1]
    %91 = vrot.lane.b32.xlu0 %v90, 4
    %v92 = vpop.permute.xlu0 %91
    %vm93 = vcmask 64544
    %94 = vst.msk [vmem:[#allocation0] sm:$0x1] %vm93, %v92
    %s96 = ssub.s32 2, 1
    %v97 = vld [vmem:[#allocation0] sm:%s96]
    %s99 = ssub.s32 2, 1
    %100 = vst [vmem:[%s1] sm:%s99] %v97

// kernel: tile.10
$region0: #{tile.10}
  #allocation0 [shape = 's32[1]{0}', space=sflag, size = 0x4, scoped, tag = 'scoped memory for tile.10']
  %s0 = inlined_call_operand.vmem [shape: f32[4], index: 0, kind: input, shape index: {}]
  %s1 = inlined_call_operand.vmem [shape: f32[16,4], index: 1, kind: output, shape index: {}]
  // Predicated region
  $region2: #{tile.10} parent=0 // pred_check
    _
  $region3: #{tile.10} parent=0 // pred_check_branch
    %3 = sbr.rel (0) target = $region5
  $region4: #{tile.10} parent=0 // pred_region
    _
  $region5: #{tile.10} parent=0 // pred_fallthru
    _
  %v4 = vld [vmem:[%s0] ss:$0 sm:$0xff]
  %5 = vst [vmem:[%s1] sm:$0xff] %v4
  %s6 = scalar_lea.vmem %s1, 8
  %7 = vst [vmem:[%s6] sm:$0xff] %v4

// kernel: _fwd_impl.3
$region0: #{_fwd_impl.3}
  #allocation0 [shape = 'u32[]', space=smem, size = 0x4, offset = 0x4, fixed_abs, tag = 'smem constant byte address 0x4 - core index']
  #allocation1 [shape = 'u32[72,128]{1,0:T(1,128)}', space=vmem, size = 0x9000, scoped, tag = 'internal scratch']
  %s0 = inlined_call_operand.vmem [shape: f32[32,64], index: 0, kind: input, shape index: {}]
  %s1 = inlined_call_operand.vmem [shape: f32[1,64], index: 1, kind: input, shape index: {}]
  %s2 = inlined_call_operand.vmem [shape: f32[1,64], index: 2, kind: input, shape index: {}]
  %s3 = inlined_call_operand.vmem [shape: f32[32,64], index: 3, kind: output, shape index: {}]
  %s4 = sld [smem:[#allocation0]]
  $region22: #{_fwd_impl.3} parent=0
    _
  %s6 = ssub.s32 1, %s4
  %s7 = scalar_select 0, %s6, %s4
  // Predicated region
  $region2: #{_fwd_impl.3} parent=0 // pred_check
    _
  $region3: #{_fwd_impl.3} parent=0 // pred_check_branch
    %9 = sbr.rel (0) target = $region5
  $region4: #{_fwd_impl.3} parent=0 // pred_region
    _
  $region5: #{_fwd_impl.3} parent=0 // pred_fallthru
    _
  // Predicated region
  $region6: #{_fwd_impl.3} parent=0 // pred_check
    _
  $region7: #{_fwd_impl.3} parent=0 // pred_check_branch
    %11 = sbr.rel (0) target = $region9
  $region8: #{_fwd_impl.3} parent=0 // pred_region
    _
  $region9: #{_fwd_impl.3} parent=0 // pred_fallthru
    _
  // Predicated region
  $region10: #{_fwd_impl.3} parent=0 // pred_check
    _
  $region11: #{_fwd_impl.3} parent=0 // pred_check_branch
    %13 = sbr.rel (0) target = $region13
  $region12: #{_fwd_impl.3} parent=0 // pred_region
    _
  $region13: #{_fwd_impl.3} parent=0 // pred_fallthru
    _
  %v14 = vld [vmem:[%s0] sm:$0xff]
  %v15 = vld [vmem:[%s0 + $0x8] sm:$0xff]
  %v16 = vld [vmem:[%s0 + $0x10] sm:$0xff]
  %v17 = vld [vmem:[%s0 + $0x18] sm:$0xff]
  %v18 = vld [vmem:[%s1] sm:$0x1]
  %v20 = vperm.slane %v18, 0
  %v22 = vmul.f32 %v14, %v20
  %v23 = vmul.f32 %v15, %v20
  %v24 = vmul.f32 %v16, %v20
  %v25 = vmul.f32 %v17, %v20
  %v26 = vld [vmem:[%s2] sm:$0x1]
  %v28 = vperm.slane %v26, 0
  %v30 = vadd.f32 %v22, %v28
  %v31 = vadd.f32 %v23, %v28
  %v32 = vadd.f32 %v24, %v28
  %v33 = vadd.f32 %v25, %v28
  %v34 = vmax.f32 %v30, 0.0
  %v35 = vmax.f32 %v31, 0.0
  %v36 = vmax.f32 %v32, 0.0
  %v37 = vmax.f32 %v33, 0.0
  %vm38 = vcmask 523264
  %39 = vst.msk [vmem:[%s3] sm:$0xff] %vm38, %v34
  %40 = vst.msk [vmem:[%s3 + $0x8] sm:$0xff] %vm38, %v35
  %41 = vst.msk [vmem:[%s3 + $0x10] sm:$0xff] %vm38, %v36
  %42 = vst.msk [vmem:[%s3 + $0x18] sm:$0xff] %vm38, %v37
  // Predicated region
  $region14: #{_fwd_impl.3} parent=0 // pred_check
    _
  $region15: #{_fwd_impl.3} parent=0 // pred_check_branch
    %44 = sbr.rel (0) target = $region17
  $region16: #{_fwd_impl.3} parent=0 // pred_region
    _
  $region17: #{_fwd_impl.3} parent=0 // pred_fallthru
    _
  // Predicated region
  $region18: #{_fwd_impl.3} parent=0 // pred_check
    _
  $region19: #{_fwd_impl.3} parent=0 // pred_check_branch
    %46 = sbr.rel (0) target = $region21
  $region20: #{_fwd_impl.3} parent=0 // pred_region
    _
  $region21: #{_fwd_impl.3} parent=0 // pred_fallthru
    _

// kernel: _fwd_impl.4
$region0: #{_fwd_impl.4}
  #allocation0 [shape = 'u32[]', space=smem, size = 0x4, offset = 0x4, fixed_abs, tag = 'smem constant byte address 0x4 - core index']
  #allocation1 [shape = 'u32[72,128]{1,0:T(1,128)}', space=vmem, size = 0x9000, scoped, tag = 'internal scratch']
  %s0 = inlined_call_operand.vmem [shape: bf16[128,36], index: 0, kind: input, shape index: {}]
  %s1 = inlined_call_operand.vmem [shape: bf16[36,128], index: 1, kind: input, shape index: {}]
  %s2 = inlined_call_operand.vmem [shape: f32[1,128], index: 2, kind: input, shape index: {}]
  %s3 = inlined_call_operand.vmem [shape: f32[1,128], index: 3, kind: input, shape index: {}]
  %s4 = inlined_call_operand.vmem [shape: bf16[128,128], index: 4, kind: output, shape index: {}]
  %s5 = sld [smem:[#allocation0]]
  $region26: #{_fwd_impl.4} parent=0
    _
  %s7 = ssub.s32 1, %s5
  %s8 = scalar_select 0, %s7, %s5
  // Predicated region
  $region2: #{_fwd_impl.4} parent=0 // pred_check
    _
  $region3: #{_fwd_impl.4} parent=0 // pred_check_branch
    %10 = sbr.rel (0) target = $region5
  $region4: #{_fwd_impl.4} parent=0 // pred_region
    _
  $region5: #{_fwd_impl.4} parent=0 // pred_fallthru
    _
  // Predicated region
  $region6: #{_fwd_impl.4} parent=0 // pred_check
    _
  $region7: #{_fwd_impl.4} parent=0 // pred_check_branch
    %12 = sbr.rel (0) target = $region9
  $region8: #{_fwd_impl.4} parent=0 // pred_region
    _
  $region9: #{_fwd_impl.4} parent=0 // pred_fallthru
    _
  // Predicated region
  $region10: #{_fwd_impl.4} parent=0 // pred_check
    _
  $region11: #{_fwd_impl.4} parent=0 // pred_check_branch
    %14 = sbr.rel (0) target = $region13
  $region12: #{_fwd_impl.4} parent=0 // pred_region
    _
  $region13: #{_fwd_impl.4} parent=0 // pred_fallthru
    _
  // Predicated region
  $region14: #{_fwd_impl.4} parent=0 // pred_check
    _
  $region15: #{_fwd_impl.4} parent=0 // pred_check_branch
    %16 = sbr.rel (0) target = $region17
  $region16: #{_fwd_impl.4} parent=0 // pred_region
    _
  $region17: #{_fwd_impl.4} parent=0 // pred_fallthru
    _
  %v18 = vld [vmem:[%s0] sm:$0xf]
  %v19 = vld [vmem:[%s0 + $0x4] sm:$0xf]
  %v20 = vld [vmem:[%s0 + $0x8] sm:$0xf]
  %v21 = vld [vmem:[%s0 + $0xc] sm:$0xf]
  %v22 = vld [vmem:[%s0 + $0x10] sm:$0xf]
  %v23 = vld [vmem:[%s0 + $0x14] sm:$0xf]
  %v24 = vld [vmem:[%s0 + $0x18] sm:$0xf]
  %v25 = vld [vmem:[%s0 + $0x1c] sm:$0xf]
  %v26 = vld [vmem:[%s0 + $0x20] sm:$0xf]
  %v27 = vld [vmem:[%s0 + $0x24] sm:$0xf]
  %v28 = vld [vmem:[%s0 + $0x28] sm:$0xf]
  %v29 = vld [vmem:[%s0 + $0x2c] sm:$0xf]
  %v30 = vld [vmem:[%s0 + $0x30] sm:$0xf]
  %v31 = vld [vmem:[%s0 + $0x34] sm:$0xf]
  %v32 = vld [vmem:[%s0 + $0x38] sm:$0xf]
  %v33 = vld [vmem:[%s0 + $0x3c] sm:$0xf]
  %v34 = vld [vmem:[%s1] sm:$0xf]
  %v35 = vld [vmem:[%s1 + $0x4] sm:$0xf]
  %v36 = vld [vmem:[%s1 + $0x8] sm:$0xf]
  %v37 = vld [vmem:[%s1 + $0xc] sm:$0xf]
  %v38 = vld [vmem:[%s1 + $0x10] sm:$0x3]
  %v55 = vunpack.c.l.b16 %v18
  %v56 = vunpack.c.l.b16 %v19
  %v57 = vunpack.c.l.b16 %v20
  %v58 = vunpack.c.l.b16 %v21
  %v59 = vunpack.c.l.b16 %v22
  %v60 = vunpack.c.l.b16 %v23
  %v61 = vunpack.c.l.b16 %v24
  %v62 = vunpack.c.l.b16 %v25
  %v63 = vunpack.c.l.b16 %v26
  %v64 = vunpack.c.l.b16 %v27
  %v65 = vunpack.c.l.b16 %v28
  %v66 = vunpack.c.l.b16 %v29
  %v67 = vunpack.c.l.b16 %v30
  %v68 = vunpack.c.l.b16 %v31
  %v69 = vunpack.c.l.b16 %v32
  %v70 = vunpack.c.l.b16 %v33
  %v71 = vpack.c.b16 %v56, %v55
  %v72 = vpack.c.b16 %v58, %v57
  %v73 = vpack.c.b16 %v60, %v59
  %v74 = vpack.c.b16 %v62, %v61
  %v75 = vpack.c.b16 %v64, %v63
  %v76 = vpack.c.b16 %v66, %v65
  %v77 = vpack.c.b16 %v68, %v67
  %v78 = vpack.c.b16 %v70, %v69
  %v84 = vunpack.c.l.b16 %v34
  %v85 = vunpack.c.l.b16 %v35
  %v86 = vunpack.c.l.b16 %v36
  %v87 = vunpack.c.l.b16 %v37
  %v88 = vunpack.c.l.b16 %v38
  %v89 = vpack.c.b16 %v85, %v84
  %v90 = vpack.c.b16 %v87, %v86
  %v91 = vpack.c.b16 %v88, %v88
  %vm94 = vcmask 293888
  %v96 = vsel %vm94, %v71, 0
  %v99 = vsel %vm94, %v72, 0
  %v102 = vsel %vm94, %v73, 0
  %v105 = vsel %vm94, %v74, 0
  %v108 = vsel %vm94, %v75, 0
  %v111 = vsel %vm94, %v76, 0
  %v114 = vsel %vm94, %v77, 0
  %v117 = vsel %vm94, %v78, 0
  %vm119 = vcmask 1041408
  %v121 = vsel %vm119, %v91, 0
  %123 = vmatpush.bf16.msra.mxu0 0
  %124 = vmatpush.bf16.msra.mxu0 0
  %125 = vmatpush.bf16.msra.mxu0 0
  %126 = vmatpush.bf16.msra.mxu0 0
  %127 = vmatpush.bf16.msra.mxu0 0
  %128 = vmatpush.bf16.msra.mxu0 %v121
  %129 = vmatpush.bf16.msra.mxu0 %v90
  %130 = vmatpush.bf16.msra.mxu0 %v89
  %131 = vmatmul.bf16.gmra.mxu0 %v96
  %v132 = vpop.f32.mrf.mxu0
  %v133 = vadd.f32 0.0, %v132
  %v134 = vpop.f32.mrf.mxu0
  %v135 = vadd.f32 0.0, %v134
  %136 = vmatmul.bf16.gmra.mxu0 %v99
  %v137 = vpop.f32.mrf.mxu0
  %v138 = vadd.f32 0.0, %v137
  %v139 = vpop.f32.mrf.mxu0
  %v140 = vadd.f32 0.0, %v139
  %141 = vmatmul.bf16.gmra.mxu0 %v102
  %v142 = vpop.f32.mrf.mxu0
  %v143 = vadd.f32 0.0, %v142
  %v144 = vpop.f32.mrf.mxu0
  %v145 = vadd.f32 0.0, %v144
  %146 = vmatmul.bf16.gmra.mxu0 %v105
  %v147 = vpop.f32.mrf.mxu0
  %v148 = vadd.f32 0.0, %v147
  %v149 = vpop.f32.mrf.mxu0
  %v150 = vadd.f32 0.0, %v149
  %151 = vmatmul.bf16.gmra.mxu0 %v108
  %v152 = vpop.f32.mrf.mxu0
  %v153 = vadd.f32 0.0, %v152
  %v154 = vpop.f32.mrf.mxu0
  %v155 = vadd.f32 0.0, %v154
  %156 = vmatmul.bf16.gmra.mxu0 %v111
  %v157 = vpop.f32.mrf.mxu0
  %v158 = vadd.f32 0.0, %v157
  %v159 = vpop.f32.mrf.mxu0
  %v160 = vadd.f32 0.0, %v159
  %161 = vmatmul.bf16.gmra.mxu0 %v114
  %v162 = vpop.f32.mrf.mxu0
  %v163 = vadd.f32 0.0, %v162
  %v164 = vpop.f32.mrf.mxu0
  %v165 = vadd.f32 0.0, %v164
  %166 = vmatmul.bf16.gmra.mxu0 %v117
  %v167 = vpop.f32.mrf.mxu0
  %v168 = vadd.f32 0.0, %v167
  %v169 = vpop.f32.mrf.mxu0
  %v170 = vadd.f32 0.0, %v169
  %171 = vdwg.mxu0
  %v172 = vld [vmem:[%s2] sm:$0x1]
  %v174 = vperm.slane %v172, 0
  %v176 = vmul.f32 %v133, %v174
  %v177 = vmul.f32 %v135, %v174
  %v178 = vmul.f32 %v138, %v174
  %v179 = vmul.f32 %v140, %v174
  %v180 = vmul.f32 %v143, %v174
  %v181 = vmul.f32 %v145, %v174
  %v182 = vmul.f32 %v148, %v174
  %v183 = vmul.f32 %v150, %v174
  %v184 = vmul.f32 %v153, %v174
  %v185 = vmul.f32 %v155, %v174
  %v186 = vmul.f32 %v158, %v174
  %v187 = vmul.f32 %v160, %v174
  %v188 = vmul.f32 %v163, %v174
  %v189 = vmul.f32 %v165, %v174
  %v190 = vmul.f32 %v168, %v174
  %v191 = vmul.f32 %v170, %v174
  %v192 = vld [vmem:[%s3] sm:$0x1]
  %v194 = vperm.slane %v192, 0
  %v196 = vadd.f32 %v176, %v194
  %v197 = vadd.f32 %v177, %v194
  %v198 = vadd.f32 %v178, %v194
  %v199 = vadd.f32 %v179, %v194
  %v200 = vadd.f32 %v180, %v194
  %v201 = vadd.f32 %v181, %v194
  %v202 = vadd.f32 %v182, %v194
  %v203 = vadd.f32 %v183, %v194
  %v204 = vadd.f32 %v184, %v194
  %v205 = vadd.f32 %v185, %v194
  %v206 = vadd.f32 %v186, %v194
  %v207 = vadd.f32 %v187, %v194
  %v208 = vadd.f32 %v188, %v194
  %v209 = vadd.f32 %v189, %v194
  %v210 = vadd.f32 %v190, %v194
  %v211 = vadd.f32 %v191, %v194
  %v212 = vmax.f32 %v196, 0.0
  %v213 = vmax.f32 %v197, 0.0
  %v214 = vmax.f32 %v198, 0.0
  %v215 = vmax.f32 %v199, 0.0
  %v216 = vmax.f32 %v200, 0.0
  %v217 = vmax.f32 %v201, 0.0
  %v218 = vmax.f32 %v202, 0.0
  %v219 = vmax.f32 %v203, 0.0
  %v220 = vmax.f32 %v204, 0.0
  %v221 = vmax.f32 %v205, 0.0
  %v222 = vmax.f32 %v206, 0.0
  %v223 = vmax.f32 %v207, 0.0
  %v224 = vmax.f32 %v208, 0.0
  %v225 = vmax.f32 %v209, 0.0
  %v226 = vmax.f32 %v210, 0.0
  %v227 = vmax.f32 %v211, 0.0
  %v228 = vpack.c.bf16 %v212, %v212
  %v229 = vpack.c.bf16 %v213, %v213
  %v230 = vpack.c.bf16 %v214, %v214
  %v231 = vpack.c.bf16 %v215, %v215
  %v232 = vpack.c.bf16 %v216, %v216
  %v233 = vpack.c.bf16 %v217, %v217
  %v234 = vpack.c.bf16 %v218, %v218
  %v235 = vpack.c.bf16 %v219, %v219
  %v236 = vpack.c.bf16 %v220, %v220
  %v237 = vpack.c.bf16 %v221, %v221
  %v238 = vpack.c.bf16 %v222, %v222
  %v239 = vpack.c.bf16 %v223, %v223
  %v240 = vpack.c.bf16 %v224, %v224
  %v241 = vpack.c.bf16 %v225, %v225
  %v242 = vpack.c.bf16 %v226, %v226
  %v243 = vpack.c.bf16 %v227, %v227
  %244 = vst [vmem:[%s4] sm:$0xf] %v228
  %245 = vst [vmem:[%s4 + $0x4] sm:$0xf] %v229
  %246 = vst [vmem:[%s4 + $0x8] sm:$0xf] %v230
  %247 = vst [vmem:[%s4 + $0xc] sm:$0xf] %v231
  %248 = vst [vmem:[%s4 + $0x10] sm:$0xf] %v232
  %249 = vst [vmem:[%s4 + $0x14] sm:$0xf] %v233
  %250 = vst [vmem:[%s4 + $0x18] sm:$0xf] %v234
  %251 = vst [vmem:[%s4 + $0x1c] sm:$0xf] %v235
  %252 = vst [vmem:[%s4 + $0x20] sm:$0xf] %v236
  %253 = vst [vmem:[%s4 + $0x24] sm:$0xf] %v237
  %254 = vst [vmem:[%s4 + $0x28] sm:$0xf] %v238
  %255 = vst [vmem:[%s4 + $0x2c] sm:$0xf] %v239
  %256 = vst [vmem:[%s4 + $0x30] sm:$0xf] %v240
  %257 = vst [vmem:[%s4 + $0x34] sm:$0xf] %v241
  %258 = vst [vmem:[%s4 + $0x38] sm:$0xf] %v242
  %259 = vst [vmem:[%s4 + $0x3c] sm:$0xf] %v243
  // Predicated region
  $region18: #{_fwd_impl.4} parent=0 // pred_check
    _
  $region19: #{_fwd_impl.4} parent=0 // pred_check_branch
    %261 = sbr.rel (0) target = $region21
  $region20: #{_fwd_impl.4} parent=0 // pred_region
    _
  $region21: #{_fwd_impl.4} parent=0 // pred_fallthru
    _
  // Predicated region
  $region22: #{_fwd_impl.4} parent=0 // pred_check
    _
  $region23: #{_fwd_impl.4} parent=0 // pred_check_branch
    %263 = sbr.rel (0) target = $region25
  $region24: #{_fwd_impl.4} parent=0 // pred_region
    _
  $region25: #{_fwd_impl.4} parent=0 // pred_fallthru
    _

// kernel: _fwd_impl.5
$region0: #{_fwd_impl.5}
  #allocation0 [shape = 'u32[]', space=smem, size = 0x4, offset = 0x4, fixed_abs, tag = 'smem constant byte address 0x4 - core index']
  #allocation1 [shape = 'u32[72,128]{1,0:T(1,128)}', space=vmem, size = 0x9000, scoped, tag = 'internal scratch']
  %s0 = inlined_call_operand.vmem [shape: bf16[128,72], index: 0, kind: input, shape index: {}]
  %s1 = inlined_call_operand.vmem [shape: bf16[72,128], index: 1, kind: input, shape index: {}]
  %s2 = inlined_call_operand.vmem [shape: bf16[128,4], index: 2, kind: input, shape index: {}]
  %s3 = inlined_call_operand.vmem [shape: bf16[4,128], index: 3, kind: input, shape index: {}]
  %s4 = inlined_call_operand.vmem [shape: f32[128,128], index: 4, kind: output, shape index: {}]
  %s5 = sld [smem:[#allocation0]]
  $region26: #{_fwd_impl.5} parent=0
    _
  %s7 = ssub.s32 1, %s5
  %s8 = scalar_select 0, %s7, %s5
  // Predicated region
  $region2: #{_fwd_impl.5} parent=0 // pred_check
    _
  $region3: #{_fwd_impl.5} parent=0 // pred_check_branch
    %10 = sbr.rel (0) target = $region5
  $region4: #{_fwd_impl.5} parent=0 // pred_region
    _
  $region5: #{_fwd_impl.5} parent=0 // pred_fallthru
    _
  // Predicated region
  $region6: #{_fwd_impl.5} parent=0 // pred_check
    _
  $region7: #{_fwd_impl.5} parent=0 // pred_check_branch
    %12 = sbr.rel (0) target = $region9
  $region8: #{_fwd_impl.5} parent=0 // pred_region
    _
  $region9: #{_fwd_impl.5} parent=0 // pred_fallthru
    _
  // Predicated region
  $region10: #{_fwd_impl.5} parent=0 // pred_check
    _
  $region11: #{_fwd_impl.5} parent=0 // pred_check_branch
    %14 = sbr.rel (0) target = $region13
  $region12: #{_fwd_impl.5} parent=0 // pred_region
    _
  $region13: #{_fwd_impl.5} parent=0 // pred_fallthru
    _
  // Predicated region
  $region14: #{_fwd_impl.5} parent=0 // pred_check
    _
  $region15: #{_fwd_impl.5} parent=0 // pred_check_branch
    %16 = sbr.rel (0) target = $region17
  $region16: #{_fwd_impl.5} parent=0 // pred_region
    _
  $region17: #{_fwd_impl.5} parent=0 // pred_fallthru
    _
  %v18 = vld [vmem:[%s0] sm:$0xf]
  %v19 = vld [vmem:[%s0 + $0x4] sm:$0xf]
  %v20 = vld [vmem:[%s0 + $0x8] sm:$0xf]
  %v21 = vld [vmem:[%s0 + $0xc] sm:$0xf]
  %v22 = vld [vmem:[%s0 + $0x10] sm:$0xf]
  %v23 = vld [vmem:[%s0 + $0x14] sm:$0xf]
  %v24 = vld [vmem:[%s0 + $0x18] sm:$0xf]
  %v25 = vld [vmem:[%s0 + $0x1c] sm:$0xf]
  %v26 = vld [vmem:[%s0 + $0x20] sm:$0xf]
  %v27 = vld [vmem:[%s0 + $0x24] sm:$0xf]
  %v28 = vld [vmem:[%s0 + $0x28] sm:$0xf]
  %v29 = vld [vmem:[%s0 + $0x2c] sm:$0xf]
  %v30 = vld [vmem:[%s0 + $0x30] sm:$0xf]
  %v31 = vld [vmem:[%s0 + $0x34] sm:$0xf]
  %v32 = vld [vmem:[%s0 + $0x38] sm:$0xf]
  %v33 = vld [vmem:[%s0 + $0x3c] sm:$0xf]
  %v34 = vld [vmem:[%s1] sm:$0xf]
  %v35 = vld [vmem:[%s1 + $0x4] sm:$0xf]
  %v36 = vld [vmem:[%s1 + $0x8] sm:$0xf]
  %v37 = vld [vmem:[%s1 + $0xc] sm:$0xf]
  %v38 = vld [vmem:[%s1 + $0x10] sm:$0xf]
  %v39 = vld [vmem:[%s1 + $0x14] sm:$0xf]
  %v40 = vld [vmem:[%s1 + $0x18] sm:$0xf]
  %v41 = vld [vmem:[%s1 + $0x1c] sm:$0xf]
  %v42 = vld [vmem:[%s1 + $0x20] sm:$0xf]
  %v43 = vld [vmem:[%s2] sm:$0xf]
  %v44 = vld [vmem:[%s2 + $0x4] sm:$0xf]
  %v45 = vld [vmem:[%s2 + $0x8] sm:$0xf]
  %v46 = vld [vmem:[%s2 + $0xc] sm:$0xf]
  %v47 = vld [vmem:[%s2 + $0x10] sm:$0xf]
  %v48 = vld [vmem:[%s2 + $0x14] sm:$0xf]
  %v49 = vld [vmem:[%s2 + $0x18] sm:$0xf]
  %v50 = vld [vmem:[%s2 + $0x1c] sm:$0xf]
  %v51 = vld [vmem:[%s2 + $0x20] sm:$0xf]
  %v52 = vld [vmem:[%s2 + $0x24] sm:$0xf]
  %v53 = vld [vmem:[%s2 + $0x28] sm:$0xf]
  %v54 = vld [vmem:[%s2 + $0x2c] sm:$0xf]
  %v55 = vld [vmem:[%s2 + $0x30] sm:$0xf]
  %v56 = vld [vmem:[%s2 + $0x34] sm:$0xf]
  %v57 = vld [vmem:[%s2 + $0x38] sm:$0xf]
  %v58 = vld [vmem:[%s2 + $0x3c] sm:$0xf]
  %v59 = vld [vmem:[%s3] sm:$0x3]
  %v76 = vunpack.c.l.b16 %v43
  %v77 = vunpack.c.l.b16 %v44
  %v78 = vunpack.c.l.b16 %v45
  %v79 = vunpack.c.l.b16 %v46
  %v80 = vunpack.c.l.b16 %v47
  %v81 = vunpack.c.l.b16 %v48
  %v82 = vunpack.c.l.b16 %v49
  %v83 = vunpack.c.l.b16 %v50
  %v84 = vunpack.c.l.b16 %v51
  %v85 = vunpack.c.l.b16 %v52
  %v86 = vunpack.c.l.b16 %v53
  %v87 = vunpack.c.l.b16 %v54
  %v88 = vunpack.c.l.b16 %v55
  %v89 = vunpack.c.l.b16 %v56
  %v90 = vunpack.c.l.b16 %v57
  %v91 = vunpack.c.l.b16 %v58
  %v92 = vpack.c.b16 %v77, %v76
  %v93 = vpack.c.b16 %v79, %v78
  %v94 = vpack.c.b16 %v81, %v80
  %v95 = vpack.c.b16 %v83, %v82
  %v96 = vpack.c.b16 %v85, %v84
  %v97 = vpack.c.b16 %v87, %v86
  %v98 = vpack.c.b16 %v89, %v88
  %v99 = vpack.c.b16 %v91, %v90
  %vm100 = vcmask 31744
  %v102 = vsel %vm100, %v92, 0
  %v105 = vsel %vm100, %v93, 0
  %v108 = vsel %vm100, %v94, 0
  %v111 = vsel %vm100, %v95, 0
  %v114 = vsel %vm100, %v96, 0
  %v117 = vsel %vm100, %v97, 0
  %v120 = vsel %vm100, %v98, 0
  %v123 = vsel %vm100, %v99, 0
  %vm125 = vcmask 1041408
  %v127 = vsel %vm125, %v59, 0
  %129 = vmatpush.bf16.msra.mxu0 0
  %130 = vmatpush.bf16.msra.mxu0 0
  %131 = vmatpush.bf16.msra.mxu0 0
  %132 = vmatpush.bf16.msra.mxu0 0
  %133 = vmatpush.bf16.msra.mxu0 0
  %134 = vmatpush.bf16.msra.mxu0 0
  %135 = vmatpush.bf16.msra.mxu0 0
  %136 = vmatpush.bf16.msra.mxu0 %v127
  %137 = vmatmul.bf16.gmra.mxu0 %v102
  %v138 = vpop.f32.mrf.mxu0
  %v139 = vadd.f32 0.0, %v138
  %v140 = vpop.f32.mrf.mxu0
  %v141 = vadd.f32 0.0, %v140
  %142 = vmatmul.bf16.gmra.mxu0 %v105
  %v143 = vpop.f32.mrf.mxu0
  %v144 = vadd.f32 0.0, %v143
  %v145 = vpop.f32.mrf.mxu0
  %v146 = vadd.f32 0.0, %v145
  %147 = vmatmul.bf16.gmra.mxu0 %v108
  %v148 = vpop.f32.mrf.mxu0
  %v149 = vadd.f32 0.0, %v148
  %v150 = vpop.f32.mrf.mxu0
  %v151 = vadd.f32 0.0, %v150
  %152 = vmatmul.bf16.gmra.mxu0 %v111
  %v153 = vpop.f32.mrf.mxu0
  %v154 = vadd.f32 0.0, %v153
  %v155 = vpop.f32.mrf.mxu0
  %v156 = vadd.f32 0.0, %v155
  %157 = vmatmul.bf16.gmra.mxu0 %v114
  %v158 = vpop.f32.mrf.mxu0
  %v159 = vadd.f32 0.0, %v158
  %v160 = vpop.f32.mrf.mxu0
  %v161 = vadd.f32 0.0, %v160
  %162 = vmatmul.bf16.gmra.mxu0 %v117
  %v163 = vpop.f32.mrf.mxu0
  %v164 = vadd.f32 0.0, %v163
  %v165 = vpop.f32.mrf.mxu0
  %v166 = vadd.f32 0.0, %v165
  %167 = vmatmul.bf16.gmra.mxu0 %v120
  %v168 = vpop.f32.mrf.mxu0
  %v169 = vadd.f32 0.0, %v168
  %v170 = vpop.f32.mrf.mxu0
  %v171 = vadd.f32 0.0, %v170
  %172 = vmatmul.bf16.gmra.mxu0 %v123
  %v173 = vpop.f32.mrf.mxu0
  %v174 = vadd.f32 0.0, %v173
  %v175 = vpop.f32.mrf.mxu0
  %v176 = vadd.f32 0.0, %v175
  %177 = vdwg.mxu0
  %v194 = vunpack.c.l.b16 %v18
  %v195 = vunpack.c.l.b16 %v19
  %v196 = vunpack.c.l.b16 %v20
  %v197 = vunpack.c.l.b16 %v21
  %v198 = vunpack.c.l.b16 %v22
  %v199 = vunpack.c.l.b16 %v23
  %v200 = vunpack.c.l.b16 %v24
  %v201 = vunpack.c.l.b16 %v25
  %v202 = vunpack.c.l.b16 %v26
  %v203 = vunpack.c.l.b16 %v27
  %v204 = vunpack.c.l.b16 %v28
  %v205 = vunpack.c.l.b16 %v29
  %v206 = vunpack.c.l.b16 %v30
  %v207 = vunpack.c.l.b16 %v31
  %v208 = vunpack.c.l.b16 %v32
  %v209 = vunpack.c.l.b16 %v33
  %v210 = vpack.c.b16 %v195, %v194
  %v211 = vpack.c.b16 %v197, %v196
  %v212 = vpack.c.b16 %v199, %v198
  %v213 = vpack.c.b16 %v201, %v200
  %v214 = vpack.c.b16 %v203, %v202
  %v215 = vpack.c.b16 %v205, %v204
  %v216 = vpack.c.b16 %v207, %v206
  %v217 = vpack.c.b16 %v209, %v208
  %v227 = vunpack.c.l.b16 %v34
  %v228 = vunpack.c.l.b16 %v35
  %v229 = vunpack.c.l.b16 %v36
  %v230 = vunpack.c.l.b16 %v37
  %v231 = vunpack.c.l.b16 %v38
  %v232 = vunpack.c.l.b16 %v39
  %v233 = vunpack.c.l.b16 %v40
  %v234 = vunpack.c.l.b16 %v41
  %v235 = vunpack.c.l.b16 %v42
  %v236 = vpack.c.b16 %v228, %v227
  %v237 = vpack.c.b16 %v230, %v229
  %v238 = vpack.c.b16 %v232, %v231
  %v239 = vpack.c.b16 %v234, %v233
  %v240 = vpack.c.b16 %v235, %v235
  %vm245 = vcmask 588800
  %v247 = vsel %vm245, %v210, 0
  %v250 = vsel %vm245, %v211, 0
  %v253 = vsel %vm245, %v212, 0
  %v256 = vsel %vm245, %v213, 0
  %v259 = vsel %vm245, %v214, 0
  %v262 = vsel %vm245, %v215, 0
  %v265 = vsel %vm245, %v216, 0
  %v268 = vsel %vm245, %v217, 0
  %vm270 = vcmask 1043456
  %v272 = vsel %vm270, %v240, 0
  %274 = vmatpush.bf16.msra.mxu0 0
  %275 = vmatpush.bf16.msra.mxu0 0
  %276 = vmatpush.bf16.msra.mxu0 0
  %277 = vmatpush.bf16.msra.mxu0 %v272
  %278 = vmatpush.bf16.msra.mxu0 %v239
  %279 = vmatpush.bf16.msra.mxu0 %v238
  %280 = vmatpush.bf16.msra.mxu0 %v237
  %281 = vmatpush.bf16.msra.mxu0 %v236
  %282 = vmatmul.bf16.gmra.mxu0 %v247
  %v283 = vpop.f32.mrf.mxu0
  %v284 = vadd.f32 %v139, %v283
  %v285 = vpop.f32.mrf.mxu0
  %v286 = vadd.f32 %v141, %v285
  %287 = vmatmul.bf16.gmra.mxu0 %v250
  %v288 = vpop.f32.mrf.mxu0
  %v289 = vadd.f32 %v144, %v288
  %v290 = vpop.f32.mrf.mxu0
  %v291 = vadd.f32 %v146, %v290
  %292 = vmatmul.bf16.gmra.mxu0 %v253
  %v293 = vpop.f32.mrf.mxu0
  %v294 = vadd.f32 %v149, %v293
  %v295 = vpop.f32.mrf.mxu0
  %v296 = vadd.f32 %v151, %v295
  %297 = vmatmul.bf16.gmra.mxu0 %v256
  %v298 = vpop.f32.mrf.mxu0
  %v299 = vadd.f32 %v154, %v298
  %v300 = vpop.f32.mrf.mxu0
  %v301 = vadd.f32 %v156, %v300
  %302 = vmatmul.bf16.gmra.mxu0 %v259
  %v303 = vpop.f32.mrf.mxu0
  %v304 = vadd.f32 %v159, %v303
  %v305 = vpop.f32.mrf.mxu0
  %v306 = vadd.f32 %v161, %v305
  %307 = vmatmul.bf16.gmra.mxu0 %v262
  %v308 = vpop.f32.mrf.mxu0
  %v309 = vadd.f32 %v164, %v308
  %v310 = vpop.f32.mrf.mxu0
  %v311 = vadd.f32 %v166, %v310
  %312 = vmatmul.bf16.gmra.mxu0 %v265
  %v313 = vpop.f32.mrf.mxu0
  %v314 = vadd.f32 %v169, %v313
  %v315 = vpop.f32.mrf.mxu0
  %v316 = vadd.f32 %v171, %v315
  %317 = vmatmul.bf16.gmra.mxu0 %v268
  %v318 = vpop.f32.mrf.mxu0
  %v319 = vadd.f32 %v174, %v318
  %v320 = vpop.f32.mrf.mxu0
  %v321 = vadd.f32 %v176, %v320
  %322 = vdwg.mxu0
  %323 = vst [vmem:[%s4] sm:$0xff] %v284
  %324 = vst [vmem:[%s4 + $0x8] sm:$0xff] %v286
  %325 = vst [vmem:[%s4 + $0x10] sm:$0xff] %v289
  %326 = vst [vmem:[%s4 + $0x18] sm:$0xff] %v291
  %327 = vst [vmem:[%s4 + $0x20] sm:$0xff] %v294
  %328 = vst [vmem:[%s4 + $0x28] sm:$0xff] %v296
  %329 = vst [vmem:[%s4 + $0x30] sm:$0xff] %v299
  %330 = vst [vmem:[%s4 + $0x38] sm:$0xff] %v301
  %331 = vst [vmem:[%s4 + $0x40] sm:$0xff] %v304
  %332 = vst [vmem:[%s4 + $0x48] sm:$0xff] %v306
  %333 = vst [vmem:[%s4 + $0x50] sm:$0xff] %v309
  %334 = vst [vmem:[%s4 + $0x58] sm:$0xff] %v311
  %335 = vst [vmem:[%s4 + $0x60] sm:$0xff] %v314
  %336 = vst [vmem:[%s4 + $0x68] sm:$0xff] %v316
  %337 = vst [vmem:[%s4 + $0x70] sm:$0xff] %v319
  %338 = vst [vmem:[%s4 + $0x78] sm:$0xff] %v321
  // Predicated region
  $region18: #{_fwd_impl.5} parent=0 // pred_check
    _
  $region19: #{_fwd_impl.5} parent=0 // pred_check_branch
    %340 = sbr.rel (0) target = $region21
  $region20: #{_fwd_impl.5} parent=0 // pred_region
    _
  $region21: #{_fwd_impl.5} parent=0 // pred_fallthru
    _
  // Predicated region
  $region22: #{_fwd_impl.5} parent=0 // pred_check
    _
  $region23: #{_fwd_impl.5} parent=0 // pred_check_branch
    %342 = sbr.rel (0) target = $region25
  $region24: #{_fwd_impl.5} parent=0 // pred_region
    _
  $region25: #{_fwd_impl.5} parent=0 // pred_fallthru
    _

</llo_original>
